<compile_context>
chip_gen: v7x
topology: tpu7x:2x2x1
jax: 0.10.0
libtpu: 0.0.40
codegen_flags: <defaults>
</compile_context>

<pallas_src>
import functools

import jax
import jax.numpy as jnp
from jax import lax
from jax.experimental import pallas as pl
from jax.experimental.pallas import tpu as pltpu

BN_EPS = 1e-5
LEAKY_SLOPE = 0.01
LANE = 128


def _round_up(x, m):
    return (x + m - 1) // m * m


def _safe_vmem_limit():
    # Derive the scoped-VMEM budget from the chip instead of hard-coding:
    # ~48 MiB on v7x (64 MiB physical), up to ~96 MiB on v5e/v6e (128 MiB).
    cap = 64 * 1024 * 1024
    try:
        info_fn = getattr(pltpu, "get_tpu_info", None)
        if info_fn is not None:
            cap = int(info_fn().vmem_capacity_bytes)
    except Exception:
        pass
    return min((cap * 3) // 4, 100 * 1024 * 1024)


def _gemm_stats_kernel(x_ref, w_ref, b_ref, y_ref, stats_ref):
    # Pass 1: y = x @ w + b (bf16 operands, f32 MXU accumulation), plus
    # per-channel partial sum / sum-of-squares for this M tile (from f32 y,
    # so the batch statistics don't see the bf16 storage rounding).
    y = jnp.dot(x_ref[...], w_ref[...], preferred_element_type=jnp.float32)
    y = y + b_ref[...]                              # (TM, Fp) f32
    y_ref[...] = y.astype(y_ref.dtype)              # bf16 intermediate store
    s = jnp.sum(y, axis=0, keepdims=True)           # (1, Fp)  XLU sublane reduce
    ss = jnp.sum(y * y, axis=0, keepdims=True)      # (1, Fp)
    pad = jnp.zeros((6, y.shape[1]), jnp.float32)   # fill the (8, Fp) stat tile
    stats_ref[...] = jnp.concatenate([s, ss, pad], axis=0)[None, :, :]


def _bn_lrelu_kernel(y_ref, scale_ref, shift_ref, o_ref):
    # Pass 2: folded batch-norm affine (per-channel scale/shift) + LeakyReLU.
    z = y_ref[...].astype(jnp.float32) * scale_ref[...] + shift_ref[...]
    o_ref[...] = jnp.where(z > 0, z, LEAKY_SLOPE * z)


def _im2col(x, kernel_size, stride, padding):
    # x: (N, C, H, W) -> (N*OH*OW, C*KH*KW), channel-major then (kh, kw),
    # matching the flattening of the PyTorch weight (F, C, KH, KW).
    # TODO(synk): fuse patch extraction into the Pallas kernel (halo tiles +
    # KH*KW accumulated matmuls) to avoid the KH*KW x HBM expansion done here.
    n, c, h, w = x.shape
    kh = kw = kernel_size
    oh = (h + 2 * padding - kh) // stride + 1
    ow = (w + 2 * padding - kw) // stride + 1
    xp = jnp.pad(x, ((0, 0), (0, 0), (padding, padding), (padding, padding)))
    cols = []
    for i in range(kh):
        for j in range(kw):
            cols.append(
                xp[:, :, i:i + stride * oh:stride, j:j + stride * ow:stride]
            )  # (N, C, OH, OW)
    patches = jnp.stack(cols, axis=2)               # (N, C, KH*KW, OH, OW)
    patches = patches.transpose(0, 3, 4, 1, 2)      # (N, OH, OW, C, KH*KW)
    return patches.reshape(n * oh * ow, c * kh * kw), (n, oh, ow)


@functools.partial(
    jax.jit,
    static_argnames=("kernel_size", "stride", "padding", "tile_m", "compute_dtype"),
)
def conv_layering(x, weight, bias, gamma, beta, *, kernel_size, stride=1,
                  padding=0, tile_m=512, compute_dtype=jnp.bfloat16):
    """Forward of ConvLayering.  x: (N, C, H, W) f32 -> (N, F, OH, OW) f32."""
    f = weight.shape[0]
    x_cols, (n, oh, ow) = _im2col(x, kernel_size, stride, padding)   # (M, K)
    m, k = x_cols.shape

    # Lane-dense padding of the GEMM dims.
    kp = _round_up(k, LANE)
    fp = _round_up(f, LANE)

    vmem_limit = _safe_vmem_limit()
    in_bytes = jnp.dtype(compute_dtype).itemsize
    y_bytes = jnp.dtype(compute_dtype).itemsize     # bf16 intermediate y

    # M tile, auto-shrunk so the double-buffered pass-1 working set fits VMEM.
    tm = _round_up(min(tile_m, _round_up(m, 8)), 8)

    def _pass1_bytes(tm_):
        return (2 * tm_ * kp * in_bytes       # x tile (double-buffered)
                + 2 * kp * fp * in_bytes      # resident weight (2 bufs alloc'd)
                + 2 * tm_ * fp * y_bytes      # y tile (double-buffered)
                + 2 * tm_ * fp * 4            # in-kernel f32 accumulator
                + 4 * 8 * fp * 4)             # bias + stats tiles

    while tm > 64 and _pass1_bytes(tm) > vmem_limit:
        tm = max(8, _round_up(tm // 2, 8))

    mp = _round_up(m, tm)
    n_tiles = mp // tm
    n_pad_rows = mp - m

    x_p = jnp.pad(x_cols, ((0, mp - m), (0, kp - k))).astype(compute_dtype)
    w_p = jnp.pad(weight.reshape(f, k).T,
                  ((0, kp - k), (0, fp - f))).astype(compute_dtype)
    b_p = jnp.pad(bias.astype(jnp.float32), (0, fp - f)).reshape(1, fp)

    # ---- pass 1: conv GEMM + per-tile batch statistics ----
    y, stats = pl.pallas_call(
        _gemm_stats_kernel,
        out_shape=(
            jax.ShapeDtypeStruct((mp, fp), compute_dtype),
            jax.ShapeDtypeStruct((n_tiles, 8, fp), jnp.float32),
        ),
        grid_spec=pltpu.PrefetchScalarGridSpec(
            num_scalar_prefetch=0,
            grid=(n_tiles,),
            in_specs=[
                pl.BlockSpec((tm, kp), lambda i: (i, 0)),
                pl.BlockSpec((kp, fp), lambda i: (0, 0)),
                pl.BlockSpec((1, fp), lambda i: (0, 0)),
            ],
            out_specs=(
                pl.BlockSpec((tm, fp), lambda i: (i, 0)),
                pl.BlockSpec((1, 8, fp), lambda i: (i, 0, 0)),
            ),
        ),
        compiler_params=pltpu.CompilerParams(
            dimension_semantics=("parallel",),
            vmem_limit_bytes=vmem_limit,
        ),
    )(x_p, w_p, b_p)

    # Combine per-tile partials (tiny F-length vectors).  Zero-padded rows of
    # x_cols produce y == bias exactly, so subtract their contribution.
    total_sum = stats[:, 0, :].sum(axis=0) - n_pad_rows * b_p[0]
    total_sq = stats[:, 1, :].sum(axis=0) - n_pad_rows * (b_p[0] * b_p[0])
    mean = total_sum / float(m)
    var = jnp.maximum(total_sq / float(m) - mean * mean, 0.0)   # biased (train-mode)
    # TODO(synk): running_mean / running_var buffers (BatchNorm momentum state)
    # are not produced; forward normalization uses batch stats like PyTorch train mode.

    gamma_p = jnp.pad(gamma.astype(jnp.float32), (0, fp - f))
    beta_p = jnp.pad(beta.astype(jnp.float32), (0, fp - f))
    scale = gamma_p * lax.rsqrt(var + BN_EPS)    # per-channel, computed once
    shift = beta_p - mean * scale

    # ---- pass 2: normalize + affine + LeakyReLU ----
    out = pl.pallas_call(
        _bn_lrelu_kernel,
        out_shape=jax.ShapeDtypeStruct((mp, fp), jnp.float32),
        grid_spec=pltpu.PrefetchScalarGridSpec(
            num_scalar_prefetch=0,
            grid=(n_tiles,),
            in_specs=[
                pl.BlockSpec((tm, fp), lambda i: (i, 0)),
                pl.BlockSpec((1, fp), lambda i: (0, 0)),
                pl.BlockSpec((1, fp), lambda i: (0, 0)),
            ],
            out_specs=pl.BlockSpec((tm, fp), lambda i: (i, 0)),
        ),
        compiler_params=pltpu.CompilerParams(
            dimension_semantics=("parallel",),
            vmem_limit_bytes=vmem_limit,
        ),
    )(y, scale.reshape(1, fp), shift.reshape(1, fp))

    # (Mp, Fp) -> (M, F) -> (N, OH, OW, F) -> NCHW
    return out[:m, :f].reshape(n, oh, ow, f).transpose(0, 3, 1, 2)


if __name__ == "__main__":
    # Small shapes consistent with ConvLayering(4, 8, 3, stride=1, padding=1).
    N, C, H, W = 2, 4, 16, 16
    F, KS, STRIDE, PAD = 8, 3, 1, 1

    key = jax.random.PRNGKey(0)
    kx, kw, kb = jax.random.split(key, 3)

    x = jax.random.normal(kx, (N, C, H, W), dtype=jnp.float32)
    fan_in = C * KS * KS
    bound = 1.0 / (fan_in ** 0.5)
    weight = jax.random.uniform(kw, (F, C, KS, KS), jnp.float32, -bound, bound)
    bias = jax.random.uniform(kb, (F,), jnp.float32, -bound, bound)
    gamma = jnp.ones((F,), jnp.float32)
    beta = jnp.zeros((F,), jnp.float32)

    # tile_m=128 so the 512-row problem exercises the multi-tile (grid=4) path.
    y = conv_layering(x, weight, bias, gamma, beta,
                      kernel_size=KS, stride=STRIDE, padding=PAD, tile_m=128)
    jax.block_until_ready(y)
    assert y.shape == (N, F, H, W)

    # Pure-JAX reference (f32 conv + train-mode BN + LeakyReLU); bf16 MXU
    # operands and bf16 intermediate storage give ~1e-2-level deviations, so
    # use a loose tolerance.
    y_conv = lax.conv_general_dilated(
        x, weight, window_strides=(STRIDE, STRIDE),
        padding=[(PAD, PAD), (PAD, PAD)],
        dimension_numbers=("NCHW", "OIHW", "NCHW"),
    ) + bias[None, :, None, None]
    mu = y_conv.mean(axis=(0, 2, 3), keepdims=True)
    vr = ((y_conv - mu) ** 2).mean(axis=(0, 2, 3), keepdims=True)
    zr = (y_conv - mu) * lax.rsqrt(vr + BN_EPS)
    zr = zr * gamma[None, :, None, None] + beta[None, :, None, None]
    ref = jnp.where(zr > 0, zr, LEAKY_SLOPE * zr)
    assert bool(jnp.all(jnp.isfinite(y)))
    assert bool(jnp.allclose(y, ref, rtol=5e-2, atol=5e-2))

    print("KERNEL_OK")
</pallas_src>

<mosaic_0001>
module attributes {stable_mosaic.version = 11 : i64} {
  func.func @_gemm_stats_kernel(%arg0: i32, %arg1: memref<128x128xbf16, #tpu.memory_space<vmem>>, %arg2: memref<128x128xbf16, #tpu.memory_space<vmem>>, %arg3: memref<1x128xf32, #tpu.memory_space<vmem>>, %arg4: memref<128x128xbf16, #tpu.memory_space<vmem>>, %arg5: memref<1x8x128xf32, #tpu.memory_space<vmem>>) attributes {dimension_semantics = [#tpu.dimension_semantics<parallel>], iteration_bounds = array<i64: 4>, scalar_prefetch = 0 : i64, scratch_operands = 0 : i64, tpu.core_type = #tpu.core_type<tc>, window_params = [{transform_indices = @transform_0, window_bounds = array<i64: 128, 128>}, {pipeline_mode = #tpu.pipeline_mode<synchronous>, transform_indices = @transform_1, window_bounds = array<i64: 128, 128>}, {pipeline_mode = #tpu.pipeline_mode<synchronous>, transform_indices = @transform_2, window_bounds = array<i64: 1, 128>}, {transform_indices = @transform_3, window_bounds = array<i64: 128, 128>}, {transform_indices = @transform_4, window_bounds = array<i64: 1, 8, 128>}]} {
    %c0 = arith.constant 0 : index
    %c0_0 = arith.constant 0 : index
    %0 = vector.load %arg1[%c0, %c0_0] : memref<128x128xbf16, #tpu.memory_space<vmem>>, vector<128x128xbf16>
    %c0_1 = arith.constant 0 : index
    %c0_2 = arith.constant 0 : index
    %1 = vector.load %arg2[%c0_1, %c0_2] : memref<128x128xbf16, #tpu.memory_space<vmem>>, vector<128x128xbf16>
    %cst = arith.constant dense<0.000000e+00> : vector<128x128xf32>
    %2 = tpu.matmul %0, %1, %cst {dimension_numbers = #tpu.dot_dimension_numbers<[1], [0], [0], [1], [0, 0, 1, 1], [], []>} : vector<128x128xbf16>, vector<128x128xbf16>, vector<128x128xf32> -> vector<128x128xf32>
    %c0_3 = arith.constant 0 : index
    %c0_4 = arith.constant 0 : index
    %3 = vector.load %arg3[%c0_3, %c0_4] : memref<1x128xf32, #tpu.memory_space<vmem>>, vector<1x128xf32>
    %4 = vector.broadcast %3 : vector<1x128xf32> to vector<128x128xf32>
    %5 = arith.addf %2, %4 : vector<128x128xf32>
    %6 = arith.truncf %5 : vector<128x128xf32> to vector<128x128xbf16>
    %c0_5 = arith.constant 0 : index
    %c0_6 = arith.constant 0 : index
    %7 = vector.load %arg4[%c0_5, %c0_6] : memref<128x128xbf16, #tpu.memory_space<vmem>>, vector<128x128xbf16>
    tpu.vector_store %arg4[%c0_5, %c0_6], %6 {strides = array<i32>} : memref<128x128xbf16, #tpu.memory_space<vmem>>, vector<128x128xbf16>,
    %cst_7 = arith.constant dense<0.000000e+00> : vector<128xf32>
    %8 = vector.multi_reduction <add>, %5, %cst_7 [0] : vector<128x128xf32> to vector<128xf32>
    %9 = vector.shape_cast %8 : vector<128xf32> to vector<1x128xf32>
    %10 = arith.mulf %5, %5 : vector<128x128xf32>
    %cst_8 = arith.constant dense<0.000000e+00> : vector<128xf32>
    %11 = vector.multi_reduction <add>, %10, %cst_8 [0] : vector<128x128xf32> to vector<128xf32>
    %12 = vector.shape_cast %11 : vector<128xf32> to vector<1x128xf32>
    %cst_9 = arith.constant 0.000000e+00 : f32
    %13 = vector.broadcast %cst_9 : f32 to vector<6x128xf32>
    %14 = tpu.concatenate %9, %12, %13 in 0 : vector<1x128xf32>, vector<1x128xf32>, vector<6x128xf32> -> vector<8x128xf32>
    %15 = vector.shape_cast %14 : vector<8x128xf32> to vector<1x8x128xf32>
    %c0_10 = arith.constant 0 : index
    %c0_11 = arith.constant 0 : index
    %c0_12 = arith.constant 0 : index
    %16 = vector.load %arg5[%c0_10, %c0_11, %c0_12] : memref<1x8x128xf32, #tpu.memory_space<vmem>>, vector<1x8x128xf32>
    tpu.vector_store %arg5[%c0_10, %c0_11, %c0_12], %15 {strides = array<i32>} : memref<1x8x128xf32, #tpu.memory_space<vmem>>, vector<1x8x128xf32>,
    return
  }
  func.func @transform_0(%arg0: i32) -> (i32, i32) {
    %c0_i32 = arith.constant 0 : i32
    %c0_i32_0 = arith.constant 0 : i32
    return %arg0, %c0_i32 : i32, i32
  }
  func.func @transform_1(%arg0: i32) -> (i32, i32) {
    %c0_i32 = arith.constant 0 : i32
    %c0_i32_0 = arith.constant 0 : i32
    %c0_i32_1 = arith.constant 0 : i32
    return %c0_i32, %c0_i32_0 : i32, i32
  }
  func.func @transform_2(%arg0: i32) -> (i32, i32) {
    %c0_i32 = arith.constant 0 : i32
    %c0_i32_0 = arith.constant 0 : i32
    %c0_i32_1 = arith.constant 0 : i32
    return %c0_i32, %c0_i32_0 : i32, i32
  }
  func.func @transform_3(%arg0: i32) -> (i32, i32) {
    %c0_i32 = arith.constant 0 : i32
    %c0_i32_0 = arith.constant 0 : i32
    return %arg0, %c0_i32 : i32, i32
  }
  func.func @transform_4(%arg0: i32) -> (i32, i32, i32) {
    %c0_i32 = arith.constant 0 : i32
    %c0_i32_0 = arith.constant 0 : i32
    %c0_i32_1 = arith.constant 0 : i32
    return %arg0, %c0_i32, %c0_i32_0 : i32, i32, i32
  }
}

module attributes {stable_mosaic.version = 11 : i64} {
  func.func @_bn_lrelu_kernel(%arg0: i32, %arg1: memref<128x128xbf16, #tpu.memory_space<vmem>>, %arg2: memref<1x128xf32, #tpu.memory_space<vmem>>, %arg3: memref<1x128xf32, #tpu.memory_space<vmem>>, %arg4: memref<128x128xf32, #tpu.memory_space<vmem>>) attributes {dimension_semantics = [#tpu.dimension_semantics<parallel>], iteration_bounds = array<i64: 4>, scalar_prefetch = 0 : i64, scratch_operands = 0 : i64, tpu.core_type = #tpu.core_type<tc>, window_params = [{transform_indices = @transform_0, window_bounds = array<i64: 128, 128>}, {pipeline_mode = #tpu.pipeline_mode<synchronous>, transform_indices = @transform_1, window_bounds = array<i64: 1, 128>}, {pipeline_mode = #tpu.pipeline_mode<synchronous>, transform_indices = @transform_2, window_bounds = array<i64: 1, 128>}, {transform_indices = @transform_3, window_bounds = array<i64: 128, 128>}]} {
    %c0 = arith.constant 0 : index
    %c0_0 = arith.constant 0 : index
    %0 = vector.load %arg1[%c0, %c0_0] : memref<128x128xbf16, #tpu.memory_space<vmem>>, vector<128x128xbf16>
    %1 = arith.extf %0 : vector<128x128xbf16> to vector<128x128xf32>
    %c0_1 = arith.constant 0 : index
    %c0_2 = arith.constant 0 : index
    %2 = vector.load %arg2[%c0_1, %c0_2] : memref<1x128xf32, #tpu.memory_space<vmem>>, vector<1x128xf32>
    %3 = vector.broadcast %2 : vector<1x128xf32> to vector<128x128xf32>
    %4 = arith.mulf %1, %3 : vector<128x128xf32>
    %c0_3 = arith.constant 0 : index
    %c0_4 = arith.constant 0 : index
    %5 = vector.load %arg3[%c0_3, %c0_4] : memref<1x128xf32, #tpu.memory_space<vmem>>, vector<1x128xf32>
    %6 = vector.broadcast %5 : vector<1x128xf32> to vector<128x128xf32>
    %7 = arith.addf %4, %6 : vector<128x128xf32>
    %cst = arith.constant 0.000000e+00 : f32
    %8 = vector.broadcast %cst : f32 to vector<128x128xf32>
    %9 = arith.cmpf ogt, %7, %8 : vector<128x128xf32>
    %cst_5 = arith.constant 0.00999999977 : f32
    %10 = vector.broadcast %cst_5 : f32 to vector<128x128xf32>
    %11 = arith.mulf %10, %7 : vector<128x128xf32>
    %12 = arith.select %9, %7, %11 : vector<128x128xi1>, vector<128x128xf32>
    %c0_6 = arith.constant 0 : index
    %c0_7 = arith.constant 0 : index
    %13 = vector.load %arg4[%c0_6, %c0_7] : memref<128x128xf32, #tpu.memory_space<vmem>>, vector<128x128xf32>
    tpu.vector_store %arg4[%c0_6, %c0_7], %12 {strides = array<i32>} : memref<128x128xf32, #tpu.memory_space<vmem>>, vector<128x128xf32>,
    return
  }
  func.func @transform_0(%arg0: i32) -> (i32, i32) {
    %c0_i32 = arith.constant 0 : i32
    %c0_i32_0 = arith.constant 0 : i32
    return %arg0, %c0_i32 : i32, i32
  }
  func.func @transform_1(%arg0: i32) -> (i32, i32) {
    %c0_i32 = arith.constant 0 : i32
    %c0_i32_0 = arith.constant 0 : i32
    %c0_i32_1 = arith.constant 0 : i32
    return %c0_i32, %c0_i32_0 : i32, i32
  }
  func.func @transform_2(%arg0: i32) -> (i32, i32) {
    %c0_i32 = arith.constant 0 : i32
    %c0_i32_0 = arith.constant 0 : i32
    %c0_i32_1 = arith.constant 0 : i32
    return %c0_i32, %c0_i32_0 : i32, i32
  }
  func.func @transform_3(%arg0: i32) -> (i32, i32) {
    %c0_i32 = arith.constant 0 : i32
    %c0_i32_0 = arith.constant 0 : i32
    return %arg0, %c0_i32 : i32, i32
  }
}

</mosaic_0001>

<llo_original>
// kernel: conv_layering.3
$region0: #{conv_layering.3}
  #allocation0 [shape = 'u32[]', space=smem, size = 0x4, offset = 0x4, fixed_abs, tag = 'smem constant byte address 0x4 - core index']
  #allocation1 [shape = 'u32[144,128]{1,0:T(1,128)}', space=vmem, size = 0x12000, scoped, tag = 'internal scratch']
  %s0 = inlined_call_operand.vmem [shape: bf16[512,128], index: 0, kind: input, shape index: {}]
  %s1 = inlined_call_operand.vmem [shape: f32[1,128], index: 1, kind: input, shape index: {}]
  %s2 = inlined_call_operand.vmem [shape: f32[1,128], index: 2, kind: input, shape index: {}]
  %s3 = inlined_call_operand.vmem [shape: f32[512,128], index: 3, kind: output, shape index: {}]
  %s4 = sld [smem:[#allocation0]]
  $region45: #{conv_layering.3} parent=0
    _
  %s6 = ssub.s32 1, %s4
  %s7 = scalar_select 0, %s6, %s4
  loop: start=0, step=1, limit=6
  $region2: #{conv_layering.3} parent=0 // loop_pre_header
    _
  $region3: #{conv_layering.3} parent=0 // loop_header
    %s9 = sphi 0, %s13
    %p10 = scmp.ge.s32.totalorder %s9, 6
    %s19 = sphi 0, %s21
    %s22 = sphi 0, %s19
    %s23 = sphi 0, %s22
    %s39 = sphi 0, %s23
    %s43 = sphi 0, %s43
    %s45 = sphi 0, %s43
    %s46 = sphi 0, %s45
    %s60 = sphi 0, %s46
    %s64 = sphi 0, %s64
    %s66 = sphi 0, %s64
    %s67 = sphi 0, %s66
    %s81 = sphi 0, %s67
    %s87 = sphi 0, %s89
    %s90 = sphi 0, %s87
    %s91 = sphi 0, %s90
    %s107 = sphi 0, %s91
  $region4: #{conv_layering.3} parent=0 // loop_header_branch
    %12 = sbr.rel (%p10) target = $region8
  $region5: #{conv_layering.3} parent=0 // loop_body
    %s14 = ssub.s32 %s9, 1
    %s15 = ssub.s32 %s9, 2
    %s16 = sadd.s32 %s9, 1
    %s17 = ssub.s32 %s9, %s16
    %p18 = scmp.eq.s32.totalorder %s17, 0
    %s20 = sadd.s32 %s19, 1
    %s21 = scalar_select %p18, %s19, %s20
    %p24 = pneg %p18
    %p25 = scmp.eq.s32.totalorder %s9, 3
    %p26 = por %p24, %p25
    %p27 = scmp.ne.s32.totalorder %s19, %s22
    %p28 = scmp.eq.s32.totalorder %s9, 0
    %p29 = por %p27, %p28
    %p30 = scmp.ne.s32.totalorder %s19, %s22
    %p31 = scmp.eq.s32.totalorder %s14, 3
    %p32 = por %p30, %p31
    %p33 = scmp.ne.s32.totalorder %s22, %s23
    %p34 = scmp.eq.s32.totalorder %s14, 0
    %p35 = por %p33, %p34
    %p36 = scmp.ne.s32.totalorder %s22, %s23
    %p37 = scmp.eq.s32.totalorder %s15, 3
    %p38 = por %p36, %p37
    %p40 = scmp.ne.s32.totalorder %s23, %s39
    %p41 = scmp.eq.s32.totalorder %s15, 0
    %p42 = por %p40, %p41
    %s44 = sadd.s32 %s43, 1
    %p47 = scmp.eq.s32.totalorder %s9, 3
    %p48 = scmp.ne.s32.totalorder %s43, %s45
    %p49 = scmp.eq.s32.totalorder %s9, 0
    %p50 = por %p48, %p49
    %p51 = scmp.ne.s32.totalorder %s43, %s45
    %p52 = scmp.eq.s32.totalorder %s14, 3
    %p53 = por %p51, %p52
    %p54 = scmp.ne.s32.totalorder %s45, %s46
    %p55 = scmp.eq.s32.totalorder %s14, 0
    %p56 = por %p54, %p55
    %p57 = scmp.ne.s32.totalorder %s45, %s46
    %p58 = scmp.eq.s32.totalorder %s15, 3
    %p59 = por %p57, %p58
    %p61 = scmp.ne.s32.totalorder %s46, %s60
    %p62 = scmp.eq.s32.totalorder %s15, 0
    %p63 = por %p61, %p62
    %s65 = sadd.s32 %s64, 1
    %p68 = scmp.eq.s32.totalorder %s9, 3
    %p69 = scmp.ne.s32.totalorder %s64, %s66
    %p70 = scmp.eq.s32.totalorder %s9, 0
    %p71 = por %p69, %p70
    %p72 = scmp.ne.s32.totalorder %s64, %s66
    %p73 = scmp.eq.s32.totalorder %s14, 3
    %p74 = por %p72, %p73
    %p75 = scmp.ne.s32.totalorder %s66, %s67
    %p76 = scmp.eq.s32.totalorder %s14, 0
    %p77 = por %p75, %p76
    %p78 = scmp.ne.s32.totalorder %s66, %s67
    %p79 = scmp.eq.s32.totalorder %s15, 3
    %p80 = por %p78, %p79
    %p82 = scmp.ne.s32.totalorder %s67, %s81
    %p83 = scmp.eq.s32.totalorder %s15, 0
    %p84 = por %p82, %p83
    %s85 = ssub.s32 %s9, %s16
    %p86 = scmp.eq.s32.totalorder %s85, 0
    %s88 = sadd.s32 %s87, 1
    %s89 = scalar_select %p86, %s87, %s88
    %p92 = pneg %p86
    %p93 = scmp.eq.s32.totalorder %s9, 3
    %p94 = por %p92, %p93
    %p95 = scmp.ne.s32.totalorder %s87, %s90
    %p96 = scmp.eq.s32.totalorder %s9, 0
    %p97 = por %p95, %p96
    %p98 = scmp.ne.s32.totalorder %s87, %s90
    %p99 = scmp.eq.s32.totalorder %s14, 3
    %p100 = por %p98, %p99
    %p101 = scmp.ne.s32.totalorder %s90, %s91
    %p102 = scmp.eq.s32.totalorder %s14, 0
    %p103 = por %p101, %p102
    %p104 = scmp.ne.s32.totalorder %s90, %s91
    %p105 = scmp.eq.s32.totalorder %s15, 3
    %p106 = por %p104, %p105
    %p108 = scmp.ne.s32.totalorder %s91, %s107
    %p109 = scmp.eq.s32.totalorder %s15, 0
    %p110 = por %p108, %p109
    %p111 = scmp.le.s32.totalorder 1, %s9
    %p112 = scmp.lt.s32.totalorder %s9, 5
    %p113 = pnand %p111, %p112
    %p114 = pneg %p113
    // Predicated region
    $region9: #{conv_layering.3} parent=5 // pred_check
      _
    $region10: #{conv_layering.3} parent=5 // pred_check_branch
      %116 = sbr.rel (%p113) target = $region12
    $region11: #{conv_layering.3} parent=5 // pred_region
      %s117 = ssub.s32 %s9, 1
      // Predicated region
      $region13: #{conv_layering.3} parent=11 // pred_check
        %p118 = pneg %p56
      $region14: #{conv_layering.3} parent=11 // pred_check_branch
        %120 = sbr.rel (%p118) target = $region16
      $region15: #{conv_layering.3} parent=11 // pred_region
        _
      $region16: #{conv_layering.3} parent=11 // pred_fallthru
        _
      // Predicated region
      $region17: #{conv_layering.3} parent=11 // pred_check
        %p121 = pneg %p77
      $region18: #{conv_layering.3} parent=11 // pred_check_branch
        %123 = sbr.rel (%p121) target = $region20
      $region19: #{conv_layering.3} parent=11 // pred_region
        _
      $region20: #{conv_layering.3} parent=11 // pred_fallthru
        _
    $region12: #{conv_layering.3} parent=5 // pred_fallthru
      _
    %p124 = scmp.lt.s32.totalorder %s9, 4
    // Predicated region
    $region21: #{conv_layering.3} parent=5 // pred_check
      %p125 = pneg %p124
    $region22: #{conv_layering.3} parent=5 // pred_check_branch
      %127 = sbr.rel (%p125) target = $region24
    $region23: #{conv_layering.3} parent=5 // pred_region
      // Predicated region
      $region25: #{conv_layering.3} parent=23 // pred_check
        %p128 = pneg %p29
      $region26: #{conv_layering.3} parent=23 // pred_check_branch
        %130 = sbr.rel (%p128) target = $region28
      $region27: #{conv_layering.3} parent=23 // pred_region
        %s131 = smul.u32 16, %s9
        %p132 = scmp.lt.s32.totalorder %s131, 63
        %s133 = scalar_select %p132, %s131, 63
        %s134 = smul.addr %s133, 4
        %s135 = scalar_lea.vmem %s0, %s134
        %s136 = smul.u32 16, %s9
      $region28: #{conv_layering.3} parent=23 // pred_fallthru
        _
    $region24: #{conv_layering.3} parent=5 // pred_fallthru
      _
    %p137 = scmp.le.s32.totalorder 1, %s9
    %p138 = scmp.lt.s32.totalorder %s9, 5
    %p139 = pnand %p137, %p138
    %p140 = pneg %p139
    // Predicated region
    $region29: #{conv_layering.3} parent=5 // pred_check
      _
    $region30: #{conv_layering.3} parent=5 // pred_check_branch
      %142 = sbr.rel (%p139) target = $region32
    $region31: #{conv_layering.3} parent=5 // pred_region
      %s143 = ssub.s32 %s9, 1
      %s144 = smul.u32 16, %s14
      %p145 = scmp.lt.s32.totalorder %s144, 63
      %s146 = scalar_select %p145, %s144, 63
      %s147 = smul.addr %s146, 4
      %s148 = scalar_lea.vmem %s0, %s147
      %p149 = pneg %p35
      %p150 = pneg %p32
      %p151 = pneg %p56
      %p152 = pneg %p53
      %p153 = pneg %p77
      %p154 = pneg %p74
      %p155 = pneg %p103
      %p156 = pneg %p100
      %s157 = smul.u32 16, %s14
      %p158 = scmp.lt.s32.totalorder %s157, 63
      %s159 = scalar_select %p158, %s157, 63
      %s160 = smul.addr %s159, 8
      %s161 = scalar_lea.vmem %s3, %s160
      %s162 = smul.u32 16, %s14
      %p163 = scmp.lt.s32.totalorder %s162, 63
      %s164 = scalar_select %p163, %s162, 63
      %s165 = smul.addr %s164, 4
      %s166 = scalar_lea.vmem %s0, %s165
      %s167 = smul.u32 16, %s14
      %s168 = smul.u32 16, %s14
      %p169 = scmp.lt.s32.totalorder %s168, 63
      %s170 = scalar_select %p169, %s168, 63
      %s171 = smul.addr %s170, 8
      %s172 = scalar_lea.vmem %s3, %s171
      %s173 = smul.u32 16, %s14
      %v174 = vld [vmem:[%s166] sm:$0xf]
      %v175 = vld [vmem:[%s166 + $0x4] sm:$0xf]
      %v176 = vld [vmem:[%s166 + $0x8] sm:$0xf]
      %v177 = vld [vmem:[%s166 + $0xc] sm:$0xf]
      %v178 = vld [vmem:[%s166 + $0x10] sm:$0xf]
      %v179 = vld [vmem:[%s166 + $0x14] sm:$0xf]
      %v180 = vld [vmem:[%s166 + $0x18] sm:$0xf]
      %v181 = vld [vmem:[%s166 + $0x1c] sm:$0xf]
      %v182 = vld [vmem:[%s166 + $0x20] sm:$0xf]
      %v183 = vld [vmem:[%s166 + $0x24] sm:$0xf]
      %v184 = vld [vmem:[%s166 + $0x28] sm:$0xf]
      %v185 = vld [vmem:[%s166 + $0x2c] sm:$0xf]
      %v186 = vld [vmem:[%s166 + $0x30] sm:$0xf]
      %v187 = vld [vmem:[%s166 + $0x34] sm:$0xf]
      %v188 = vld [vmem:[%s166 + $0x38] sm:$0xf]
      %v189 = vld [vmem:[%s166 + $0x3c] sm:$0xf]
      %v190 = vunpack.c.l.bf16 %v174
      %v191 = vunpack.c.l.bf16 %v175
      %v192 = vunpack.c.l.bf16 %v176
      %v193 = vunpack.c.l.bf16 %v177
      %v194 = vunpack.c.l.bf16 %v178
      %v195 = vunpack.c.l.bf16 %v179
      %v196 = vunpack.c.l.bf16 %v180
      %v197 = vunpack.c.l.bf16 %v181
      %v198 = vunpack.c.l.bf16 %v182
      %v199 = vunpack.c.l.bf16 %v183
      %v200 = vunpack.c.l.bf16 %v184
      %v201 = vunpack.c.l.bf16 %v185
      %v202 = vunpack.c.l.bf16 %v186
      %v203 = vunpack.c.l.bf16 %v187
      %v204 = vunpack.c.l.bf16 %v188
      %v205 = vunpack.c.l.bf16 %v189
      %v206 = vld [vmem:[%s1] sm:$0x1]
      %v208 = vlaneseq
      %v209 = vshrl.u32 %v208, 7
      %v210 = vsub.s32 0, %v209
      %v211 = vrot.slane %v206, %v210
      %v213 = vmul.f32 %v190, %v211
      %v214 = vmul.f32 %v191, %v211
      %v215 = vmul.f32 %v192, %v211
      %v216 = vmul.f32 %v193, %v211
      %v217 = vmul.f32 %v194, %v211
      %v218 = vmul.f32 %v195, %v211
      %v219 = vmul.f32 %v196, %v211
      %v220 = vmul.f32 %v197, %v211
      %v221 = vmul.f32 %v198, %v211
      %v222 = vmul.f32 %v199, %v211
      %v223 = vmul.f32 %v200, %v211
      %v224 = vmul.f32 %v201, %v211
      %v225 = vmul.f32 %v202, %v211
      %v226 = vmul.f32 %v203, %v211
      %v227 = vmul.f32 %v204, %v211
      %v228 = vmul.f32 %v205, %v211
      %v229 = vld [vmem:[%s2] sm:$0x1]
      %v231 = vlaneseq
      %v232 = vshrl.u32 %v231, 7
      %v233 = vsub.s32 0, %v232
      %v234 = vrot.slane %v229, %v233
      %v236 = vadd.f32 %v213, %v234
      %v237 = vadd.f32 %v214, %v234
      %v238 = vadd.f32 %v215, %v234
      %v239 = vadd.f32 %v216, %v234
      %v240 = vadd.f32 %v217, %v234
      %v241 = vadd.f32 %v218, %v234
      %v242 = vadd.f32 %v219, %v234
      %v243 = vadd.f32 %v220, %v234
      %v244 = vadd.f32 %v221, %v234
      %v245 = vadd.f32 %v222, %v234
      %v246 = vadd.f32 %v223, %v234
      %v247 = vadd.f32 %v224, %v234
      %v248 = vadd.f32 %v225, %v234
      %v249 = vadd.f32 %v226, %v234
      %v250 = vadd.f32 %v227, %v234
      %v251 = vadd.f32 %v228, %v234
      %vm252 = vcmp.gt.f32.partialorder %v236, 0.0
      %vm253 = vcmp.gt.f32.partialorder %v237, 0.0
      %vm254 = vcmp.gt.f32.partialorder %v238, 0.0
      %vm255 = vcmp.gt.f32.partialorder %v239, 0.0
      %vm256 = vcmp.gt.f32.partialorder %v240, 0.0
      %vm257 = vcmp.gt.f32.partialorder %v241, 0.0
      %vm258 = vcmp.gt.f32.partialorder %v242, 0.0
      %vm259 = vcmp.gt.f32.partialorder %v243, 0.0
      %vm260 = vcmp.gt.f32.partialorder %v244, 0.0
      %vm261 = vcmp.gt.f32.partialorder %v245, 0.0
      %vm262 = vcmp.gt.f32.partialorder %v246, 0.0
      %vm263 = vcmp.gt.f32.partialorder %v247, 0.0
      %vm264 = vcmp.gt.f32.partialorder %v248, 0.0
      %vm265 = vcmp.gt.f32.partialorder %v249, 0.0
      %vm266 = vcmp.gt.f32.partialorder %v250, 0.0
      %vm267 = vcmp.gt.f32.partialorder %v251, 0.0
      %v268 = vmul.f32 %v236, 0.01
      %v269 = vmul.f32 %v237, 0.01
      %v270 = vmul.f32 %v238, 0.01
      %v271 = vmul.f32 %v239, 0.01
      %v272 = vmul.f32 %v240, 0.01
      %v273 = vmul.f32 %v241, 0.01
      %v274 = vmul.f32 %v242, 0.01
      %v275 = vmul.f32 %v243, 0.01
      %v276 = vmul.f32 %v244, 0.01
      %v277 = vmul.f32 %v245, 0.01
      %v278 = vmul.f32 %v246, 0.01
      %v279 = vmul.f32 %v247, 0.01
      %v280 = vmul.f32 %v248, 0.01
      %v281 = vmul.f32 %v249, 0.01
      %v282 = vmul.f32 %v250, 0.01
      %v283 = vmul.f32 %v251, 0.01
      %v284 = vsel %vm252, %v236, %v268
      %v285 = vsel %vm253, %v237, %v269
      %v286 = vsel %vm254, %v238, %v270
      %v287 = vsel %vm255, %v239, %v271
      %v288 = vsel %vm256, %v240, %v272
      %v289 = vsel %vm257, %v241, %v273
      %v290 = vsel %vm258, %v242, %v274
      %v291 = vsel %vm259, %v243, %v275
      %v292 = vsel %vm260, %v244, %v276
      %v293 = vsel %vm261, %v245, %v277
      %v294 = vsel %vm262, %v246, %v278
      %v295 = vsel %vm263, %v247, %v279
      %v296 = vsel %vm264, %v248, %v280
      %v297 = vsel %vm265, %v249, %v281
      %v298 = vsel %vm266, %v250, %v282
      %v299 = vsel %vm267, %v251, %v283
      %300 = vst [vmem:[%s172] sm:$0xff] %v284
      %301 = vst [vmem:[%s172 + $0x8] sm:$0xff] %v285
      %302 = vst [vmem:[%s172 + $0x10] sm:$0xff] %v286
      %303 = vst [vmem:[%s172 + $0x18] sm:$0xff] %v287
      %304 = vst [vmem:[%s172 + $0x20] sm:$0xff] %v288
      %305 = vst [vmem:[%s172 + $0x28] sm:$0xff] %v289
      %306 = vst [vmem:[%s172 + $0x30] sm:$0xff] %v290
      %307 = vst [vmem:[%s172 + $0x38] sm:$0xff] %v291
      %308 = vst [vmem:[%s172 + $0x40] sm:$0xff] %v292
      %309 = vst [vmem:[%s172 + $0x48] sm:$0xff] %v293
      %310 = vst [vmem:[%s172 + $0x50] sm:$0xff] %v294
      %311 = vst [vmem:[%s172 + $0x58] sm:$0xff] %v295
      %312 = vst [vmem:[%s172 + $0x60] sm:$0xff] %v296
      %313 = vst [vmem:[%s172 + $0x68] sm:$0xff] %v297
      %314 = vst [vmem:[%s172 + $0x70] sm:$0xff] %v298
      %315 = vst [vmem:[%s172 + $0x78] sm:$0xff] %v299
      %s316 = smul.u32 16, %s14
      %p317 = scmp.lt.s32.totalorder %s316, 63
      %s318 = scalar_select %p317, %s316, 63
      %s319 = smul.addr %s318, 8
      %s320 = scalar_lea.vmem %s3, %s319
      // Predicated region
      $region33: #{conv_layering.3} parent=31 // pred_check
        %p321 = pneg %p100
      $region34: #{conv_layering.3} parent=31 // pred_check_branch
        %323 = sbr.rel (%p321) target = $region36
      $region35: #{conv_layering.3} parent=31 // pred_region
        %s324 = smul.u32 16, %s14
      $region36: #{conv_layering.3} parent=31 // pred_fallthru
        _
    $region32: #{conv_layering.3} parent=5 // pred_fallthru
      _
    %p325 = scmp.le.s32.totalorder 2, %s9
    // Predicated region
    $region37: #{conv_layering.3} parent=5 // pred_check
      %p326 = pneg %p325
    $region38: #{conv_layering.3} parent=5 // pred_check_branch
      %328 = sbr.rel (%p326) target = $region40
    $region39: #{conv_layering.3} parent=5 // pred_region
      %s329 = ssub.s32 %s9, 2
      // Predicated region
      $region41: #{conv_layering.3} parent=39 // pred_check
        %p330 = pneg %p106
      $region42: #{conv_layering.3} parent=39 // pred_check_branch
        %332 = sbr.rel (%p330) target = $region44
      $region43: #{conv_layering.3} parent=39 // pred_region
        %s333 = smul.u32 16, %s15
        %p334 = scmp.lt.s32.totalorder %s333, 63
        %s335 = scalar_select %p334, %s333, 63
        %s336 = smul.addr %s335, 8
        %s337 = scalar_lea.vmem %s3, %s336
      $region44: #{conv_layering.3} parent=39 // pred_fallthru
        _
    $region40: #{conv_layering.3} parent=5 // pred_fallthru
      _
  $region6: #{conv_layering.3} parent=0 // loop_footer
    %s13 = sadd.s32 1, %s9
  $region7: #{conv_layering.3} parent=0 // loop_footer_branch
    %8 = sbr.rel target = $region3
  $region8: #{conv_layering.3} parent=0 // loop_exit
    _

// kernel: conv_layering.2
$region0: #{conv_layering.2}
  #allocation0 [shape = 'u32[]', space=smem, size = 0x4, offset = 0x4, fixed_abs, tag = 'smem constant byte address 0x4 - core index']
  #allocation1 [shape = 'u32[144,128]{1,0:T(1,128)}', space=vmem, size = 0x12000, scoped, tag = 'internal scratch']
  %s0 = inlined_call_operand.vmem [shape: bf16[512,128], index: 0, kind: input, shape index: {}]
  %s1 = inlined_call_operand.vmem [shape: bf16[128,128], index: 1, kind: input, shape index: {}]
  %s2 = inlined_call_operand.vmem [shape: f32[1,128], index: 2, kind: input, shape index: {}]
  %s3 = inlined_call_operand.vmem [shape: bf16[512,128], index: 3, kind: output, shape index: {0}]
  %s4 = inlined_call_operand.vmem [shape: f32[4,8,128], index: 4, kind: output, shape index: {1}]
  %5 = xla_tuple %s3, %s4
  %s6 = sld [smem:[#allocation0]]
  $region53: #{conv_layering.2} parent=0
    _
  %s8 = ssub.s32 1, %s6
  %s9 = scalar_select 0, %s8, %s6
  loop: start=0, step=1, limit=6
  $region2: #{conv_layering.2} parent=0 // loop_pre_header
    _
  $region3: #{conv_layering.2} parent=0 // loop_header
    %s11 = sphi 0, %s15
    %p12 = scmp.ge.s32.totalorder %s11, 6
    %s21 = sphi 0, %s23
    %s24 = sphi 0, %s21
    %s25 = sphi 0, %s24
    %s41 = sphi 0, %s25
    %s45 = sphi 0, %s45
    %s47 = sphi 0, %s45
    %s48 = sphi 0, %s47
    %s62 = sphi 0, %s48
    %s66 = sphi 0, %s66
    %s68 = sphi 0, %s66
    %s69 = sphi 0, %s68
    %s83 = sphi 0, %s69
    %s89 = sphi 0, %s91
    %s92 = sphi 0, %s89
    %s93 = sphi 0, %s92
    %s109 = sphi 0, %s93
    %s115 = sphi 0, %s117
    %s118 = sphi 0, %s115
    %s119 = sphi 0, %s118
    %s135 = sphi 0, %s119
  $region4: #{conv_layering.2} parent=0 // loop_header_branch
    %14 = sbr.rel (%p12) target = $region8
  $region5: #{conv_layering.2} parent=0 // loop_body
    %s16 = ssub.s32 %s11, 1
    %s17 = ssub.s32 %s11, 2
    %s18 = sadd.s32 %s11, 1
    %s19 = ssub.s32 %s11, %s18
    %p20 = scmp.eq.s32.totalorder %s19, 0
    %s22 = sadd.s32 %s21, 1
    %s23 = scalar_select %p20, %s21, %s22
    %p26 = pneg %p20
    %p27 = scmp.eq.s32.totalorder %s11, 3
    %p28 = por %p26, %p27
    %p29 = scmp.ne.s32.totalorder %s21, %s24
    %p30 = scmp.eq.s32.totalorder %s11, 0
    %p31 = por %p29, %p30
    %p32 = scmp.ne.s32.totalorder %s21, %s24
    %p33 = scmp.eq.s32.totalorder %s16, 3
    %p34 = por %p32, %p33
    %p35 = scmp.ne.s32.totalorder %s24, %s25
    %p36 = scmp.eq.s32.totalorder %s16, 0
    %p37 = por %p35, %p36
    %p38 = scmp.ne.s32.totalorder %s24, %s25
    %p39 = scmp.eq.s32.totalorder %s17, 3
    %p40 = por %p38, %p39
    %p42 = scmp.ne.s32.totalorder %s25, %s41
    %p43 = scmp.eq.s32.totalorder %s17, 0
    %p44 = por %p42, %p43
    %s46 = sadd.s32 %s45, 1
    %p49 = scmp.eq.s32.totalorder %s11, 3
    %p50 = scmp.ne.s32.totalorder %s45, %s47
    %p51 = scmp.eq.s32.totalorder %s11, 0
    %p52 = por %p50, %p51
    %p53 = scmp.ne.s32.totalorder %s45, %s47
    %p54 = scmp.eq.s32.totalorder %s16, 3
    %p55 = por %p53, %p54
    %p56 = scmp.ne.s32.totalorder %s47, %s48
    %p57 = scmp.eq.s32.totalorder %s16, 0
    %p58 = por %p56, %p57
    %p59 = scmp.ne.s32.totalorder %s47, %s48
    %p60 = scmp.eq.s32.totalorder %s17, 3
    %p61 = por %p59, %p60
    %p63 = scmp.ne.s32.totalorder %s48, %s62
    %p64 = scmp.eq.s32.totalorder %s17, 0
    %p65 = por %p63, %p64
    %s67 = sadd.s32 %s66, 1
    %p70 = scmp.eq.s32.totalorder %s11, 3
    %p71 = scmp.ne.s32.totalorder %s66, %s68
    %p72 = scmp.eq.s32.totalorder %s11, 0
    %p73 = por %p71, %p72
    %p74 = scmp.ne.s32.totalorder %s66, %s68
    %p75 = scmp.eq.s32.totalorder %s16, 3
    %p76 = por %p74, %p75
    %p77 = scmp.ne.s32.totalorder %s68, %s69
    %p78 = scmp.eq.s32.totalorder %s16, 0
    %p79 = por %p77, %p78
    %p80 = scmp.ne.s32.totalorder %s68, %s69
    %p81 = scmp.eq.s32.totalorder %s17, 3
    %p82 = por %p80, %p81
    %p84 = scmp.ne.s32.totalorder %s69, %s83
    %p85 = scmp.eq.s32.totalorder %s17, 0
    %p86 = por %p84, %p85
    %s87 = ssub.s32 %s11, %s18
    %p88 = scmp.eq.s32.totalorder %s87, 0
    %s90 = sadd.s32 %s89, 1
    %s91 = scalar_select %p88, %s89, %s90
    %p94 = pneg %p88
    %p95 = scmp.eq.s32.totalorder %s11, 3
    %p96 = por %p94, %p95
    %p97 = scmp.ne.s32.totalorder %s89, %s92
    %p98 = scmp.eq.s32.totalorder %s11, 0
    %p99 = por %p97, %p98
    %p100 = scmp.ne.s32.totalorder %s89, %s92
    %p101 = scmp.eq.s32.totalorder %s16, 3
    %p102 = por %p100, %p101
    %p103 = scmp.ne.s32.totalorder %s92, %s93
    %p104 = scmp.eq.s32.totalorder %s16, 0
    %p105 = por %p103, %p104
    %p106 = scmp.ne.s32.totalorder %s92, %s93
    %p107 = scmp.eq.s32.totalorder %s17, 3
    %p108 = por %p106, %p107
    %p110 = scmp.ne.s32.totalorder %s93, %s109
    %p111 = scmp.eq.s32.totalorder %s17, 0
    %p112 = por %p110, %p111
    %s113 = ssub.s32 %s11, %s18
    %p114 = scmp.eq.s32.totalorder %s113, 0
    %s116 = sadd.s32 %s115, 1
    %s117 = scalar_select %p114, %s115, %s116
    %p120 = pneg %p114
    %p121 = scmp.eq.s32.totalorder %s11, 3
    %p122 = por %p120, %p121
    %p123 = scmp.ne.s32.totalorder %s115, %s118
    %p124 = scmp.eq.s32.totalorder %s11, 0
    %p125 = por %p123, %p124
    %p126 = scmp.ne.s32.totalorder %s115, %s118
    %p127 = scmp.eq.s32.totalorder %s16, 3
    %p128 = por %p126, %p127
    %p129 = scmp.ne.s32.totalorder %s118, %s119
    %p130 = scmp.eq.s32.totalorder %s16, 0
    %p131 = por %p129, %p130
    %p132 = scmp.ne.s32.totalorder %s118, %s119
    %p133 = scmp.eq.s32.totalorder %s17, 3
    %p134 = por %p132, %p133
    %p136 = scmp.ne.s32.totalorder %s119, %s135
    %p137 = scmp.eq.s32.totalorder %s17, 0
    %p138 = por %p136, %p137
    %p139 = scmp.le.s32.totalorder 1, %s11
    %p140 = scmp.lt.s32.totalorder %s11, 5
    %p141 = pnand %p139, %p140
    %p142 = pneg %p141
    // Predicated region
    $region9: #{conv_layering.2} parent=5 // pred_check
      _
    $region10: #{conv_layering.2} parent=5 // pred_check_branch
      %144 = sbr.rel (%p141) target = $region12
    $region11: #{conv_layering.2} parent=5 // pred_region
      %s145 = ssub.s32 %s11, 1
      // Predicated region
      $region13: #{conv_layering.2} parent=11 // pred_check
        %p146 = pneg %p58
      $region14: #{conv_layering.2} parent=11 // pred_check_branch
        %148 = sbr.rel (%p146) target = $region16
      $region15: #{conv_layering.2} parent=11 // pred_region
        _
      $region16: #{conv_layering.2} parent=11 // pred_fallthru
        _
      // Predicated region
      $region17: #{conv_layering.2} parent=11 // pred_check
        %p149 = pneg %p79
      $region18: #{conv_layering.2} parent=11 // pred_check_branch
        %151 = sbr.rel (%p149) target = $region20
      $region19: #{conv_layering.2} parent=11 // pred_region
        _
      $region20: #{conv_layering.2} parent=11 // pred_fallthru
        _
    $region12: #{conv_layering.2} parent=5 // pred_fallthru
      _
    %p152 = scmp.lt.s32.totalorder %s11, 4
    // Predicated region
    $region21: #{conv_layering.2} parent=5 // pred_check
      %p153 = pneg %p152
    $region22: #{conv_layering.2} parent=5 // pred_check_branch
      %155 = sbr.rel (%p153) target = $region24
    $region23: #{conv_layering.2} parent=5 // pred_region
      // Predicated region
      $region25: #{conv_layering.2} parent=23 // pred_check
        %p156 = pneg %p31
      $region26: #{conv_layering.2} parent=23 // pred_check_branch
        %158 = sbr.rel (%p156) target = $region28
      $region27: #{conv_layering.2} parent=23 // pred_region
        %s159 = smul.u32 16, %s11
        %p160 = scmp.lt.s32.totalorder %s159, 63
        %s161 = scalar_select %p160, %s159, 63
        %s162 = smul.addr %s161, 4
        %s163 = scalar_lea.vmem %s0, %s162
        %s164 = smul.u32 16, %s11
      $region28: #{conv_layering.2} parent=23 // pred_fallthru
        _
    $region24: #{conv_layering.2} parent=5 // pred_fallthru
      _
    %p165 = scmp.le.s32.totalorder 1, %s11
    %p166 = scmp.lt.s32.totalorder %s11, 5
    %p167 = pnand %p165, %p166
    %p168 = pneg %p167
    // Predicated region
    $region29: #{conv_layering.2} parent=5 // pred_check
      _
    $region30: #{conv_layering.2} parent=5 // pred_check_branch
      %170 = sbr.rel (%p167) target = $region32
    $region31: #{conv_layering.2} parent=5 // pred_region
      %s171 = ssub.s32 %s11, 1
      %s172 = smul.u32 16, %s16
      %p173 = scmp.lt.s32.totalorder %s172, 63
      %s174 = scalar_select %p173, %s172, 63
      %s175 = smul.addr %s174, 4
      %s176 = scalar_lea.vmem %s0, %s175
      %p177 = pneg %p37
      %p178 = pneg %p34
      %p179 = pneg %p58
      %p180 = pneg %p55
      %p181 = pneg %p79
      %p182 = pneg %p76
      %p183 = pneg %p105
      %p184 = pneg %p102
      %s185 = smul.u32 16, %s16
      %p186 = scmp.lt.s32.totalorder %s185, 63
      %s187 = scalar_select %p186, %s185, 63
      %s188 = smul.addr %s187, 4
      %s189 = scalar_lea.vmem %s3, %s188
      %p190 = pneg %p131
      %p191 = pneg %p128
      %p192 = scmp.lt.s32.totalorder %s16, 3
      %s193 = scalar_select %p192, %s16, 3
      %s194 = smul.addr %s193, 8
      %s195 = scalar_lea.vmem %s4, %s194
      %s196 = smul.u32 16, %s16
      %p197 = scmp.lt.s32.totalorder %s196, 63
      %s198 = scalar_select %p197, %s196, 63
      %s199 = smul.addr %s198, 4
      %s200 = scalar_lea.vmem %s0, %s199
      %s201 = smul.u32 16, %s16
      %s202 = smul.u32 16, %s16
      %p203 = scmp.lt.s32.totalorder %s202, 63
      %s204 = scalar_select %p203, %s202, 63
      %s205 = smul.addr %s204, 4
      %s206 = scalar_lea.vmem %s3, %s205
      %s207 = smul.u32 16, %s16
      %p208 = scmp.lt.s32.totalorder %s16, 3
      %s209 = scalar_select %p208, %s16, 3
      %s210 = smul.addr %s209, 8
      %s211 = scalar_lea.vmem %s4, %s210
      %v213 = vld [vmem:[%s200] sm:$0xf]
      %v214 = vld [vmem:[%s200 + $0x4] sm:$0xf]
      %v215 = vld [vmem:[%s200 + $0x8] sm:$0xf]
      %v216 = vld [vmem:[%s200 + $0xc] sm:$0xf]
      %v217 = vld [vmem:[%s200 + $0x10] sm:$0xf]
      %v218 = vld [vmem:[%s200 + $0x14] sm:$0xf]
      %v219 = vld [vmem:[%s200 + $0x18] sm:$0xf]
      %v220 = vld [vmem:[%s200 + $0x1c] sm:$0xf]
      %v221 = vld [vmem:[%s200 + $0x20] sm:$0xf]
      %v222 = vld [vmem:[%s200 + $0x24] sm:$0xf]
      %v223 = vld [vmem:[%s200 + $0x28] sm:$0xf]
      %v224 = vld [vmem:[%s200 + $0x2c] sm:$0xf]
      %v225 = vld [vmem:[%s200 + $0x30] sm:$0xf]
      %v226 = vld [vmem:[%s200 + $0x34] sm:$0xf]
      %v227 = vld [vmem:[%s200 + $0x38] sm:$0xf]
      %v228 = vld [vmem:[%s200 + $0x3c] sm:$0xf]
      %v229 = vld [vmem:[%s1] sm:$0xf]
      %v230 = vld [vmem:[%s1 + $0x4] sm:$0xf]
      %v231 = vld [vmem:[%s1 + $0x8] sm:$0xf]
      %v232 = vld [vmem:[%s1 + $0xc] sm:$0xf]
      %v233 = vld [vmem:[%s1 + $0x10] sm:$0xf]
      %v234 = vld [vmem:[%s1 + $0x14] sm:$0xf]
      %v235 = vld [vmem:[%s1 + $0x18] sm:$0xf]
      %v236 = vld [vmem:[%s1 + $0x1c] sm:$0xf]
      %v237 = vld [vmem:[%s1 + $0x20] sm:$0xf]
      %v238 = vld [vmem:[%s1 + $0x24] sm:$0xf]
      %v239 = vld [vmem:[%s1 + $0x28] sm:$0xf]
      %v240 = vld [vmem:[%s1 + $0x2c] sm:$0xf]
      %v241 = vld [vmem:[%s1 + $0x30] sm:$0xf]
      %v242 = vld [vmem:[%s1 + $0x34] sm:$0xf]
      %v243 = vld [vmem:[%s1 + $0x38] sm:$0xf]
      %v244 = vld [vmem:[%s1 + $0x3c] sm:$0xf]
      %v245 = vld [vmem:[%s2] sm:$0x1]
      %v247 = vlaneseq
      %v248 = vshrl.u32 %v247, 7
      %v249 = vsub.s32 0, %v248
      %v250 = vrot.slane %v245, %v249
      %v268 = vunpack.c.l.b16 %v213
      %v269 = vunpack.c.l.b16 %v214
      %v270 = vunpack.c.l.b16 %v215
      %v271 = vunpack.c.l.b16 %v216
      %v272 = vunpack.c.l.b16 %v217
      %v273 = vunpack.c.l.b16 %v218
      %v274 = vunpack.c.l.b16 %v219
      %v275 = vunpack.c.l.b16 %v220
      %v276 = vunpack.c.l.b16 %v221
      %v277 = vunpack.c.l.b16 %v222
      %v278 = vunpack.c.l.b16 %v223
      %v279 = vunpack.c.l.b16 %v224
      %v280 = vunpack.c.l.b16 %v225
      %v281 = vunpack.c.l.b16 %v226
      %v282 = vunpack.c.l.b16 %v227
      %v283 = vunpack.c.l.b16 %v228
      %v284 = vpack.c.b16 %v269, %v268
      %v285 = vpack.c.b16 %v271, %v270
      %v286 = vpack.c.b16 %v273, %v272
      %v287 = vpack.c.b16 %v275, %v274
      %v288 = vpack.c.b16 %v277, %v276
      %v289 = vpack.c.b16 %v279, %v278
      %v290 = vpack.c.b16 %v281, %v280
      %v291 = vpack.c.b16 %v283, %v282
      %v316 = vunpack.c.l.b16 %v229
      %v317 = vunpack.c.l.b16 %v230
      %v318 = vunpack.c.l.b16 %v231
      %v319 = vunpack.c.l.b16 %v232
      %v320 = vunpack.c.l.b16 %v233
      %v321 = vunpack.c.l.b16 %v234
      %v322 = vunpack.c.l.b16 %v235
      %v323 = vunpack.c.l.b16 %v236
      %v324 = vunpack.c.l.b16 %v237
      %v325 = vunpack.c.l.b16 %v238
      %v326 = vunpack.c.l.b16 %v239
      %v327 = vunpack.c.l.b16 %v240
      %v328 = vunpack.c.l.b16 %v241
      %v329 = vunpack.c.l.b16 %v242
      %v330 = vunpack.c.l.b16 %v243
      %v331 = vunpack.c.l.b16 %v244
      %v332 = vpack.c.b16 %v317, %v316
      %v333 = vpack.c.b16 %v319, %v318
      %v334 = vpack.c.b16 %v321, %v320
      %v335 = vpack.c.b16 %v323, %v322
      %v336 = vpack.c.b16 %v325, %v324
      %v337 = vpack.c.b16 %v327, %v326
      %v338 = vpack.c.b16 %v329, %v328
      %v339 = vpack.c.b16 %v331, %v330
      %348 = vmatprep.subr.bf16.mxu0 0
      %349 = vmatpush1.bf16.msra.mxu0 %v332
      %350 = vmatprep.subr.bf16.mxu0 0
      %351 = vmatpush1.bf16.msra.mxu0 %v333
      %352 = vmatprep.subr.bf16.mxu0 0
      %353 = vmatpush1.bf16.msra.mxu0 %v334
      %354 = vmatprep.subr.bf16.mxu0 0
      %355 = vmatpush1.bf16.msra.mxu0 %v335
      %356 = vmatprep.subr.bf16.mxu0 0
      %357 = vmatpush1.bf16.msra.mxu0 %v336
      %358 = vmatprep.subr.bf16.mxu0 0
      %359 = vmatpush1.bf16.msra.mxu0 %v337
      %360 = vmatprep.subr.bf16.mxu0 0
      %361 = vmatpush1.bf16.msra.mxu0 %v338
      %362 = vmatprep.subr.bf16.mxu0 0
      %363 = vmatpush1.bf16.msra.mxu0 %v339
      %364 = vmatprep.subr.bf16.mxu0 0
      %365 = vmatpush1.bf16.msra.mxu0 0
      %366 = vmatprep.subr.bf16.mxu0 0
      %367 = vmatpush1.bf16.msra.mxu0 0
      %368 = vmatprep.subr.bf16.mxu0 0
      %369 = vmatpush1.bf16.msra.mxu0 0
      %370 = vmatprep.subr.bf16.mxu0 0
      %371 = vmatpush1.bf16.msra.mxu0 0
      %372 = vmatprep.subr.bf16.mxu0 0
      %373 = vmatpush1.bf16.msra.mxu0 0
      %374 = vmatprep.subr.bf16.mxu0 0
      %375 = vmatpush1.bf16.msra.mxu0 0
      %376 = vmatprep.subr.bf16.mxu0 0
      %377 = vmatpush1.bf16.msra.mxu0 0
      %378 = vmatprep.subr.bf16.mxu0 0
      %379 = vmatpush1.bf16.msra.mxu0 0
      %380 = vmatprep.mubr.bf16.mxu0 0
      %381 = vmatmul.mubr.bf16.gmra.mrb[0].mxu0 %v284
      %v382 = vpop.f32.mrb[0].mxu0
      %v383 = vadd.f32 %v250, %v382
      %v384 = vpop.f32.mrb[0].mxu0
      %v385 = vpop.f32.mrb[0].mxu0
      %v386 = vadd.f32 %v250, %v385
      %v387 = vpop.f32.mrb[0].mxu0
      %388 = vmatprep.mubr.bf16.mxu0 0
      %389 = vmatmul.mubr.bf16.gmra.mrb[0].mxu0 %v285
      %v390 = vpop.f32.mrb[0].mxu0
      %v391 = vadd.f32 %v250, %v390
      %v392 = vpop.f32.mrb[0].mxu0
      %v393 = vpop.f32.mrb[0].mxu0
      %v394 = vadd.f32 %v250, %v393
      %v395 = vpop.f32.mrb[0].mxu0
      %396 = vmatprep.mubr.bf16.mxu0 0
      %397 = vmatmul.mubr.bf16.gmra.mrb[0].mxu0 %v286
      %v398 = vpop.f32.mrb[0].mxu0
      %v399 = vadd.f32 %v250, %v398
      %v400 = vpop.f32.mrb[0].mxu0
      %v401 = vpop.f32.mrb[0].mxu0
      %v402 = vadd.f32 %v250, %v401
      %v403 = vpop.f32.mrb[0].mxu0
      %404 = vmatprep.mubr.bf16.mxu0 0
      %405 = vmatmul.mubr.bf16.gmra.mrb[0].mxu0 %v287
      %v406 = vpop.f32.mrb[0].mxu0
      %v407 = vadd.f32 %v250, %v406
      %v408 = vpop.f32.mrb[0].mxu0
      %v409 = vpop.f32.mrb[0].mxu0
      %v410 = vadd.f32 %v250, %v409
      %v411 = vpop.f32.mrb[0].mxu0
      %412 = vmatprep.mubr.bf16.mxu0 0
      %413 = vmatmul.mubr.bf16.gmra.mrb[0].mxu0 %v288
      %v414 = vpop.f32.mrb[0].mxu0
      %v415 = vadd.f32 %v250, %v414
      %v416 = vpop.f32.mrb[0].mxu0
      %v417 = vpop.f32.mrb[0].mxu0
      %v418 = vadd.f32 %v250, %v417
      %v419 = vpop.f32.mrb[0].mxu0
      %420 = vmatprep.mubr.bf16.mxu0 0
      %421 = vmatmul.mubr.bf16.gmra.mrb[0].mxu0 %v289
      %v422 = vpop.f32.mrb[0].mxu0
      %v423 = vadd.f32 %v250, %v422
      %v424 = vpop.f32.mrb[0].mxu0
      %v425 = vpop.f32.mrb[0].mxu0
      %v426 = vadd.f32 %v250, %v425
      %v427 = vpop.f32.mrb[0].mxu0
      %428 = vmatprep.mubr.bf16.mxu0 0
      %429 = vmatmul.mubr.bf16.gmra.mrb[0].mxu0 %v290
      %v430 = vpop.f32.mrb[0].mxu0
      %v431 = vadd.f32 %v250, %v430
      %v432 = vpop.f32.mrb[0].mxu0
      %v433 = vpop.f32.mrb[0].mxu0
      %v434 = vadd.f32 %v250, %v433
      %v435 = vpop.f32.mrb[0].mxu0
      %436 = vmatprep.mubr.bf16.mxu0 0
      %437 = vmatmul.mubr.bf16.gmra.mrb[0].mxu0 %v291
      %v438 = vpop.f32.mrb[0].mxu0
      %v439 = vadd.f32 %v250, %v438
      %v440 = vpop.f32.mrb[0].mxu0
      %v441 = vpop.f32.mrb[0].mxu0
      %v442 = vadd.f32 %v250, %v441
      %v443 = vpop.f32.mrb[0].mxu0
      %444 = vdwg.mxu0
      %v445 = vpack.c.bf16 %v386, %v383
      %v446 = vpack.c.bf16 %v394, %v391
      %v447 = vpack.c.bf16 %v402, %v399
      %v448 = vpack.c.bf16 %v410, %v407
      %v449 = vpack.c.bf16 %v418, %v415
      %v450 = vpack.c.bf16 %v426, %v423
      %v451 = vpack.c.bf16 %v434, %v431
      %v452 = vpack.c.bf16 %v442, %v439
      %v461 = vunpack.c.l.b16 %v445
      %v462 = vunpack.c.h.b16 %v445
      %v463 = vunpack.c.l.b16 %v446
      %v464 = vunpack.c.h.b16 %v446
      %v465 = vunpack.c.l.b16 %v447
      %v466 = vunpack.c.h.b16 %v447
      %v467 = vunpack.c.l.b16 %v448
      %v468 = vunpack.c.h.b16 %v448
      %v469 = vunpack.c.l.b16 %v449
      %v470 = vunpack.c.h.b16 %v449
      %v471 = vunpack.c.l.b16 %v450
      %v472 = vunpack.c.h.b16 %v450
      %v473 = vunpack.c.l.b16 %v451
      %v474 = vunpack.c.h.b16 %v451
      %v475 = vunpack.c.l.b16 %v452
      %v476 = vunpack.c.h.b16 %v452
      %v477 = vpack.c.b16 %v461, %v461
      %v478 = vpack.c.b16 %v462, %v462
      %v479 = vpack.c.b16 %v463, %v463
      %v480 = vpack.c.b16 %v464, %v464
      %v481 = vpack.c.b16 %v465, %v465
      %v482 = vpack.c.b16 %v466, %v466
      %v483 = vpack.c.b16 %v467, %v467
      %v484 = vpack.c.b16 %v468, %v468
      %v485 = vpack.c.b16 %v469, %v469
      %v486 = vpack.c.b16 %v470, %v470
      %v487 = vpack.c.b16 %v471, %v471
      %v488 = vpack.c.b16 %v472, %v472
      %v489 = vpack.c.b16 %v473, %v473
      %v490 = vpack.c.b16 %v474, %v474
      %v491 = vpack.c.b16 %v475, %v475
      %v492 = vpack.c.b16 %v476, %v476
      %509 = vst [vmem:[%s206] sm:$0xf] %v477
      %510 = vst [vmem:[%s206 + $0x4] sm:$0xf] %v478
      %511 = vst [vmem:[%s206 + $0x8] sm:$0xf] %v479
      %512 = vst [vmem:[%s206 + $0xc] sm:$0xf] %v480
      %513 = vst [vmem:[%s206 + $0x10] sm:$0xf] %v481
      %514 = vst [vmem:[%s206 + $0x14] sm:$0xf] %v482
      %515 = vst [vmem:[%s206 + $0x18] sm:$0xf] %v483
      %516 = vst [vmem:[%s206 + $0x1c] sm:$0xf] %v484
      %517 = vst [vmem:[%s206 + $0x20] sm:$0xf] %v485
      %518 = vst [vmem:[%s206 + $0x24] sm:$0xf] %v486
      %519 = vst [vmem:[%s206 + $0x28] sm:$0xf] %v487
      %520 = vst [vmem:[%s206 + $0x2c] sm:$0xf] %v488
      %521 = vst [vmem:[%s206 + $0x30] sm:$0xf] %v489
      %522 = vst [vmem:[%s206 + $0x34] sm:$0xf] %v490
      %523 = vst [vmem:[%s206 + $0x38] sm:$0xf] %v491
      %524 = vst [vmem:[%s206 + $0x3c] sm:$0xf] %v492
      %v525 = vadd.f32 %v383, %v386
      %v526 = vadd.f32 %v525, %v391
      %v527 = vadd.f32 %v526, %v394
      %v528 = vadd.f32 %v527, %v399
      %v529 = vadd.f32 %v528, %v402
      %v530 = vadd.f32 %v529, %v407
      %v531 = vadd.f32 %v530, %v410
      %v532 = vadd.f32 %v531, %v415
      %v533 = vadd.f32 %v532, %v418
      %v534 = vadd.f32 %v533, %v423
      %v535 = vadd.f32 %v534, %v426
      %v536 = vadd.f32 %v535, %v431
      %v537 = vadd.f32 %v536, %v434
      %v538 = vadd.f32 %v537, %v439
      %v539 = vadd.f32 %v538, %v442
      %v540 = vrot.slane %v539, 4
      %v541 = vadd.f32 %v539, %v540
      %v542 = vrot.slane %v541, 2
      %v543 = vadd.f32 %v541, %v542
      %v544 = vrot.slane %v543, 1
      %v545 = vadd.f32 %v543, %v544
      %v546 = vmul.f32 %v383, %v383
      %v547 = vmul.f32 %v386, %v386
      %v548 = vmul.f32 %v391, %v391
      %v549 = vmul.f32 %v394, %v394
      %v550 = vmul.f32 %v399, %v399
      %v551 = vmul.f32 %v402, %v402
      %v552 = vmul.f32 %v407, %v407
      %v553 = vmul.f32 %v410, %v410
      %v554 = vmul.f32 %v415, %v415
      %v555 = vmul.f32 %v418, %v418
      %v556 = vmul.f32 %v423, %v423
      %v557 = vmul.f32 %v426, %v426
      %v558 = vmul.f32 %v431, %v431
      %v559 = vmul.f32 %v434, %v434
      %v560 = vmul.f32 %v439, %v439
      %v561 = vmul.f32 %v442, %v442
      %v562 = vadd.f32 %v546, %v547
      %v563 = vadd.f32 %v562, %v548
      %v564 = vadd.f32 %v563, %v549
      %v565 = vadd.f32 %v564, %v550
      %v566 = vadd.f32 %v565, %v551
      %v567 = vadd.f32 %v566, %v552
      %v568 = vadd.f32 %v567, %v553
      %v569 = vadd.f32 %v568, %v554
      %v570 = vadd.f32 %v569, %v555
      %v571 = vadd.f32 %v570, %v556
      %v572 = vadd.f32 %v571, %v557
      %v573 = vadd.f32 %v572, %v558
      %v574 = vadd.f32 %v573, %v559
      %v575 = vadd.f32 %v574, %v560
      %v576 = vadd.f32 %v575, %v561
      %v577 = vrot.slane %v576, 4
      %v578 = vadd.f32 %v576, %v577
      %v579 = vrot.slane %v578, 2
      %v580 = vadd.f32 %v578, %v579
      %v581 = vrot.slane %v580, 1
      %v582 = vadd.f32 %v580, %v581
      %vm583 = vcmask 1040384
      %v584 = vsel %vm583, %v545, %v582
      %vm585 = vcmask 1041408
      %v586 = vsel %vm585, %v584, 0.0
      %587 = vst [vmem:[%s211] sm:$0xff] %v586
      %s588 = smul.u32 16, %s16
      %p589 = scmp.lt.s32.totalorder %s588, 63
      %s590 = scalar_select %p589, %s588, 63
      %s591 = smul.addr %s590, 4
      %s592 = scalar_lea.vmem %s3, %s591
      %p593 = scmp.lt.s32.totalorder %s16, 3
      %s594 = scalar_select %p593, %s16, 3
      %s595 = smul.addr %s594, 8
      %s596 = scalar_lea.vmem %s4, %s595
      // Predicated region
      $region33: #{conv_layering.2} parent=31 // pred_check
        %p597 = pneg %p102
      $region34: #{conv_layering.2} parent=31 // pred_check_branch
        %599 = sbr.rel (%p597) target = $region36
      $region35: #{conv_layering.2} parent=31 // pred_region
        %s600 = smul.u32 16, %s16
      $region36: #{conv_layering.2} parent=31 // pred_fallthru
        _
      // Predicated region
      $region37: #{conv_layering.2} parent=31 // pred_check
        %p601 = pneg %p128
      $region38: #{conv_layering.2} parent=31 // pred_check_branch
        %603 = sbr.rel (%p601) target = $region40
      $region39: #{conv_layering.2} parent=31 // pred_region
        _
      $region40: #{conv_layering.2} parent=31 // pred_fallthru
        _
    $region32: #{conv_layering.2} parent=5 // pred_fallthru
      _
    %p604 = scmp.le.s32.totalorder 2, %s11
    // Predicated region
    $region41: #{conv_layering.2} parent=5 // pred_check
      %p605 = pneg %p604
    $region42: #{conv_layering.2} parent=5 // pred_check_branch
      %607 = sbr.rel (%p605) target = $region44
    $region43: #{conv_layering.2} parent=5 // pred_region
      %s608 = ssub.s32 %s11, 2
      // Predicated region
      $region45: #{conv_layering.2} parent=43 // pred_check
        %p609 = pneg %p108
      $region46: #{conv_layering.2} parent=43 // pred_check_branch
        %611 = sbr.rel (%p609) target = $region48
      $region47: #{conv_layering.2} parent=43 // pred_region
        %s612 = smul.u32 16, %s17
        %p613 = scmp.lt.s32.totalorder %s612, 63
        %s614 = scalar_select %p613, %s612, 63
        %s615 = smul.addr %s614, 4
        %s616 = scalar_lea.vmem %s3, %s615
      $region48: #{conv_layering.2} parent=43 // pred_fallthru
        _
      // Predicated region
      $region49: #{conv_layering.2} parent=43 // pred_check
        %p617 = pneg %p134
      $region50: #{conv_layering.2} parent=43 // pred_check_branch
        %619 = sbr.rel (%p617) target = $region52
      $region51: #{conv_layering.2} parent=43 // pred_region
        %p620 = scmp.lt.s32.totalorder %s17, 3
        %s621 = scalar_select %p620, %s17, 3
        %s622 = smul.addr %s621, 8
        %s623 = scalar_lea.vmem %s4, %s622
      $region52: #{conv_layering.2} parent=43 // pred_fallthru
        _
    $region44: #{conv_layering.2} parent=5 // pred_fallthru
      _
  $region6: #{conv_layering.2} parent=0 // loop_footer
    %s15 = sadd.s32 1, %s11
  $region7: #{conv_layering.2} parent=0 // loop_footer_branch
    %10 = sbr.rel target = $region3
  $region8: #{conv_layering.2} parent=0 // loop_exit
    _

</llo_original>
